<compile_context>
chip_gen: v7x
topology: tpu7x:2x2x1
jax: 0.10.0
libtpu: 0.0.40
codegen_flags: <defaults>
</compile_context>

<pallas_src>
import math

import jax
import jax.numpy as jnp
from jax import lax
from jax.experimental import pallas as pl
from jax.experimental.pallas import tpu as pltpu


# ---------------------------------------------------------------------------
# Fused FFN kernel: one tile of rows, both weight matrices resident in VMEM.
# ---------------------------------------------------------------------------
def _ffn_kernel(x_ref, w1_ref, b1_ref, w2_ref, b2_ref, o_ref):
    # x_ref  : (tm, d_model)
    # w1_ref : (d_ff, d_model)   torch layout (out, in)
    # b1_ref : (1, d_ff)
    # w2_ref : (d_model, d_ff)   torch layout (out, in)
    # b2_ref : (1, d_model)
    x = x_ref[...]

    # h = relu(x @ W1^T + b1); contract last dim of x with last dim of W1 so
    # the MXU consumes the torch-layout weight directly (no transpose).
    h = lax.dot_general(
        x, w1_ref[...],
        dimension_numbers=(((1,), (1,)), ((), ())),
        preferred_element_type=jnp.float32,
    ) + b1_ref[...]
    h = jnp.maximum(h, 0.0)

    # dropout(p=0.1) is identity in eval mode.

    # y = h @ W2^T + b2
    y = lax.dot_general(
        h, w2_ref[...],
        dimension_numbers=(((1,), (1,)), ((), ())),
        preferred_element_type=jnp.float32,
    ) + b2_ref[...]

    o_ref[...] = y.astype(o_ref.dtype)


# ---------------------------------------------------------------------------
# Wrapper: flatten leading dims, tile rows, call the fused kernel once.
# ---------------------------------------------------------------------------
def positionwise_feed_forward(params, x, *, tm=128):
    """x: (..., d_model) -> (..., d_model), eval-mode FFN forward."""
    orig_shape = x.shape
    d_model = orig_shape[-1]
    d_ff = params["w1"].shape[0]

    x2d = x.reshape(-1, d_model)
    M = x2d.shape[0]

    # Row tile: multiple of 8 sublanes, capped at the requested tm.
    tm = min(tm, max(8, M))
    tm = max(8, (tm // 8) * 8)
    M_pad = ((M + tm - 1) // tm) * tm
    if M_pad != M:
        x2d = jnp.pad(x2d, ((0, M_pad - M), (0, 0)))

    grid = (M_pad // tm,)

    out = pl.pallas_call(
        _ffn_kernel,
        out_shape=jax.ShapeDtypeStruct((M_pad, d_model), x.dtype),
        grid_spec=pltpu.PrefetchScalarGridSpec(
            num_scalar_prefetch=0,
            grid=grid,
            in_specs=[
                # activations: tiled over rows
                pl.BlockSpec((tm, d_model), lambda i: (i, 0)),
                # weights / biases: constant block index -> stay resident in VMEM
                pl.BlockSpec((d_ff, d_model), lambda i: (0, 0)),
                pl.BlockSpec((1, d_ff), lambda i: (0, 0)),
                pl.BlockSpec((d_model, d_ff), lambda i: (0, 0)),
                pl.BlockSpec((1, d_model), lambda i: (0, 0)),
            ],
            out_specs=pl.BlockSpec((tm, d_model), lambda i: (i, 0)),
        ),
        compiler_params=pltpu.CompilerParams(
            dimension_semantics=("parallel",),
        ),
    )(
        x2d,
        params["w1"], params["b1"].reshape(1, d_ff),
        params["w2"], params["b2"].reshape(1, d_model),
    )

    if M_pad != M:
        out = out[:M]
    return out.reshape(orig_shape)


# ---------------------------------------------------------------------------
# Parameter init matching torch nn.Linear defaults (uniform +/- 1/sqrt(fan_in))
# ---------------------------------------------------------------------------
def make_params(key, d_model, d_ff):
    k1w, k1b, k2w, k2b = jax.random.split(key, 4)
    b1 = 1.0 / math.sqrt(d_model)
    b2 = 1.0 / math.sqrt(d_ff)
    return {
        "w1": jax.random.uniform(k1w, (d_ff, d_model), jnp.float32, -b1, b1),
        "b1": jax.random.uniform(k1b, (d_ff,), jnp.float32, -b1, b1),
        "w2": jax.random.uniform(k2w, (d_model, d_ff), jnp.float32, -b2, b2),
        "b2": jax.random.uniform(k2b, (d_model,), jnp.float32, -b2, b2),
    }


def _reference_ffn(params, x):
    h = jnp.maximum(x @ params["w1"].T + params["b1"], 0.0)
    return h @ params["w2"].T + params["b2"]


if __name__ == "__main__":
    # Small shapes: batch=2, seq=8, d_model=32, d_ff=64
    B, S, D_MODEL, D_FF = 2, 8, 32, 64

    root = jax.random.PRNGKey(0)
    kp, kx = jax.random.split(root, 2)
    params = make_params(kp, D_MODEL, D_FF)
    x = jax.random.normal(kx, (B, S, D_MODEL), jnp.float32)

    # tm=8 so the toy problem still exercises a multi-step (parallel) grid.
    out = positionwise_feed_forward(params, x, tm=8)
    jax.block_until_ready(out)

    assert out.shape == (B, S, D_MODEL)

    ref = _reference_ffn(params, x)
    assert bool(jnp.allclose(out, ref, atol=1e-4, rtol=1e-4))

    print("KERNEL_OK")
</pallas_src>

<mosaic_0001>
module attributes {stable_mosaic.version = 11 : i64} {
  func.func @_ffn_kernel(%arg0: i32, %arg1: memref<8x32xf32, #tpu.memory_space<vmem>>, %arg2: memref<64x32xf32, #tpu.memory_space<vmem>>, %arg3: memref<1x64xf32, #tpu.memory_space<vmem>>, %arg4: memref<32x64xf32, #tpu.memory_space<vmem>>, %arg5: memref<1x32xf32, #tpu.memory_space<vmem>>, %arg6: memref<8x32xf32, #tpu.memory_space<vmem>>) attributes {dimension_semantics = [#tpu.dimension_semantics<parallel>], iteration_bounds = array<i64: 2>, scalar_prefetch = 0 : i64, scratch_operands = 0 : i64, tpu.core_type = #tpu.core_type<tc>, window_params = [{transform_indices = @transform_0, window_bounds = array<i64: 8, 32>}, {pipeline_mode = #tpu.pipeline_mode<synchronous>, transform_indices = @transform_1, window_bounds = array<i64: 64, 32>}, {pipeline_mode = #tpu.pipeline_mode<synchronous>, transform_indices = @transform_2, window_bounds = array<i64: 1, 64>}, {pipeline_mode = #tpu.pipeline_mode<synchronous>, transform_indices = @transform_3, window_bounds = array<i64: 32, 64>}, {pipeline_mode = #tpu.pipeline_mode<synchronous>, transform_indices = @transform_4, window_bounds = array<i64: 1, 32>}, {transform_indices = @transform_5, window_bounds = array<i64: 8, 32>}]} {
    %c0 = arith.constant 0 : index
    %c0_0 = arith.constant 0 : index
    %0 = vector.load %arg1[%c0, %c0_0] : memref<8x32xf32, #tpu.memory_space<vmem>>, vector<8x32xf32>
    %c0_1 = arith.constant 0 : index
    %c0_2 = arith.constant 0 : index
    %1 = vector.load %arg2[%c0_1, %c0_2] : memref<64x32xf32, #tpu.memory_space<vmem>>, vector<64x32xf32>
    %cst = arith.constant dense<0.000000e+00> : vector<8x64xf32>
    %2 = tpu.matmul %0, %1, %cst {dimension_numbers = #tpu.dot_dimension_numbers<[1], [1], [0], [0], [0, 0, 1, 0], [], []>} : vector<8x32xf32>, vector<64x32xf32>, vector<8x64xf32> -> vector<8x64xf32>
    %c0_3 = arith.constant 0 : index
    %c0_4 = arith.constant 0 : index
    %3 = vector.load %arg3[%c0_3, %c0_4] : memref<1x64xf32, #tpu.memory_space<vmem>>, vector<1x64xf32>
    %4 = vector.broadcast %3 : vector<1x64xf32> to vector<8x64xf32>
    %5 = arith.addf %2, %4 : vector<8x64xf32>
    %cst_5 = arith.constant 0.000000e+00 : f32
    %6 = vector.broadcast %cst_5 : f32 to vector<8x64xf32>
    %7 = arith.maximumf %5, %6 : vector<8x64xf32>
    %c0_6 = arith.constant 0 : index
    %c0_7 = arith.constant 0 : index
    %8 = vector.load %arg4[%c0_6, %c0_7] : memref<32x64xf32, #tpu.memory_space<vmem>>, vector<32x64xf32>
    %cst_8 = arith.constant dense<0.000000e+00> : vector<8x32xf32>
    %9 = tpu.matmul %7, %8, %cst_8 {dimension_numbers = #tpu.dot_dimension_numbers<[1], [1], [0], [0], [0, 0, 1, 0], [], []>} : vector<8x64xf32>, vector<32x64xf32>, vector<8x32xf32> -> vector<8x32xf32>
    %c0_9 = arith.constant 0 : index
    %c0_10 = arith.constant 0 : index
    %10 = vector.load %arg5[%c0_9, %c0_10] : memref<1x32xf32, #tpu.memory_space<vmem>>, vector<1x32xf32>
    %11 = vector.broadcast %10 : vector<1x32xf32> to vector<8x32xf32>
    %12 = arith.addf %9, %11 : vector<8x32xf32>
    %c0_11 = arith.constant 0 : index
    %c0_12 = arith.constant 0 : index
    %13 = vector.load %arg6[%c0_11, %c0_12] : memref<8x32xf32, #tpu.memory_space<vmem>>, vector<8x32xf32>
    tpu.vector_store %arg6[%c0_11, %c0_12], %12 {strides = array<i32>} : memref<8x32xf32, #tpu.memory_space<vmem>>, vector<8x32xf32>,
    return
  }
  func.func @transform_0(%arg0: i32) -> (i32, i32) {
    %c0_i32 = arith.constant 0 : i32
    %c0_i32_0 = arith.constant 0 : i32
    return %arg0, %c0_i32 : i32, i32
  }
  func.func @transform_1(%arg0: i32) -> (i32, i32) {
    %c0_i32 = arith.constant 0 : i32
    %c0_i32_0 = arith.constant 0 : i32
    %c0_i32_1 = arith.constant 0 : i32
    return %c0_i32, %c0_i32_0 : i32, i32
  }
  func.func @transform_2(%arg0: i32) -> (i32, i32) {
    %c0_i32 = arith.constant 0 : i32
    %c0_i32_0 = arith.constant 0 : i32
    %c0_i32_1 = arith.constant 0 : i32
    return %c0_i32, %c0_i32_0 : i32, i32
  }
  func.func @transform_3(%arg0: i32) -> (i32, i32) {
    %c0_i32 = arith.constant 0 : i32
    %c0_i32_0 = arith.constant 0 : i32
    %c0_i32_1 = arith.constant 0 : i32
    return %c0_i32, %c0_i32_0 : i32, i32
  }
  func.func @transform_4(%arg0: i32) -> (i32, i32) {
    %c0_i32 = arith.constant 0 : i32
    %c0_i32_0 = arith.constant 0 : i32
    %c0_i32_1 = arith.constant 0 : i32
    return %c0_i32, %c0_i32_0 : i32, i32
  }
  func.func @transform_5(%arg0: i32) -> (i32, i32) {
    %c0_i32 = arith.constant 0 : i32
    %c0_i32_0 = arith.constant 0 : i32
    return %arg0, %c0_i32 : i32, i32
  }
}

</mosaic_0001>

<llo_original>
// kernel: tpu_custom_call.1
$region0: #{tpu_custom_call.1}
  #allocation0 [shape = 'u32[]', space=smem, size = 0x4, offset = 0x4, fixed_abs, tag = 'smem constant byte address 0x4 - core index']
  #allocation1 [shape = 'u32[144,128]{1,0:T(1,128)}', space=vmem, size = 0x12000, scoped, tag = 'internal scratch']
  %s0 = inlined_call_operand.vmem [shape: f32[16,32], index: 0, kind: input, shape index: {}]
  %s1 = inlined_call_operand.vmem [shape: f32[64,32], index: 1, kind: input, shape index: {}]
  %s2 = inlined_call_operand.vmem [shape: f32[1,64], index: 2, kind: input, shape index: {}]
  %s3 = inlined_call_operand.vmem [shape: f32[32,64], index: 3, kind: input, shape index: {}]
  %s4 = inlined_call_operand.vmem [shape: f32[1,32], index: 4, kind: input, shape index: {}]
  %s5 = inlined_call_operand.hbm [shape: f32[16,32], index: 5, kind: output, shape index: {}]
  %s6 = sld [smem:[#allocation0]]
  $region53: #{tpu_custom_call.1} parent=0
    _
  %s8 = ssub.s32 1, %s6
  %s9 = scalar_select 0, %s8, %s6
  $region1: #{tpu_custom_call.1} parent=0
    #allocation2 [shape = 'u8[8192]{0}', space=vmem, size = 0x2000, scoped, tag = 'output window, operand 0']
    #allocation3 [shape = 's32[2]{0}', space=sflag, size = 0x8, scoped, tag = 'scoped memory for tpu_custom_call.1']
    %10 = vsyncpa [#allocation3], 0
    %s11 = scalar_lea.sflag [#allocation3], 1
    %12 = vsyncpa %s11, 0
    loop: start=0, step=1, limit=4
    $region2: #{tpu_custom_call.1} parent=1 // loop_pre_header
      _
    $region3: #{tpu_custom_call.1} parent=1 // loop_header
      %s14 = sphi 0, %s18
      %p15 = scmp.ge.s32.totalorder %s14, 4
      %s24 = sphi 0, %s26
      %s27 = sphi 0, %s24
      %s28 = sphi 0, %s27
      %s44 = sphi 0, %s28
      %s48 = sphi 0, %s48
      %s50 = sphi 0, %s48
      %s51 = sphi 0, %s50
      %s65 = sphi 0, %s51
      %s69 = sphi 0, %s69
      %s71 = sphi 0, %s69
      %s72 = sphi 0, %s71
      %s86 = sphi 0, %s72
      %s90 = sphi 0, %s90
      %s92 = sphi 0, %s90
      %s93 = sphi 0, %s92
      %s107 = sphi 0, %s93
      %s111 = sphi 0, %s111
      %s113 = sphi 0, %s111
      %s114 = sphi 0, %s113
      %s128 = sphi 0, %s114
      %s134 = sphi 0, %s136
      %s137 = sphi 0, %s134
      %s138 = sphi 0, %s137
      %s154 = sphi 0, %s138
    $region4: #{tpu_custom_call.1} parent=1 // loop_header_branch
      %17 = sbr.rel (%p15) target = $region8
    $region5: #{tpu_custom_call.1} parent=1 // loop_body
      %s19 = ssub.s32 %s14, 1
      %s20 = ssub.s32 %s14, 2
      %s21 = sadd.s32 %s14, 1
      %s22 = ssub.s32 %s14, %s21
      %p23 = scmp.eq.s32.totalorder %s22, 0
      %s25 = sadd.s32 %s24, 1
      %s26 = scalar_select %p23, %s24, %s25
      %p29 = pneg %p23
      %p30 = scmp.eq.s32.totalorder %s14, 1
      %p31 = por %p29, %p30
      %p32 = scmp.ne.s32.totalorder %s24, %s27
      %p33 = scmp.eq.s32.totalorder %s14, 0
      %p34 = por %p32, %p33
      %p35 = scmp.ne.s32.totalorder %s24, %s27
      %p36 = scmp.eq.s32.totalorder %s19, 1
      %p37 = por %p35, %p36
      %p38 = scmp.ne.s32.totalorder %s27, %s28
      %p39 = scmp.eq.s32.totalorder %s19, 0
      %p40 = por %p38, %p39
      %p41 = scmp.ne.s32.totalorder %s27, %s28
      %p42 = scmp.eq.s32.totalorder %s20, 1
      %p43 = por %p41, %p42
      %p45 = scmp.ne.s32.totalorder %s28, %s44
      %p46 = scmp.eq.s32.totalorder %s20, 0
      %p47 = por %p45, %p46
      %s49 = sadd.s32 %s48, 1
      %p52 = scmp.eq.s32.totalorder %s14, 1
      %p53 = scmp.ne.s32.totalorder %s48, %s50
      %p54 = scmp.eq.s32.totalorder %s14, 0
      %p55 = por %p53, %p54
      %p56 = scmp.ne.s32.totalorder %s48, %s50
      %p57 = scmp.eq.s32.totalorder %s19, 1
      %p58 = por %p56, %p57
      %p59 = scmp.ne.s32.totalorder %s50, %s51
      %p60 = scmp.eq.s32.totalorder %s19, 0
      %p61 = por %p59, %p60
      %p62 = scmp.ne.s32.totalorder %s50, %s51
      %p63 = scmp.eq.s32.totalorder %s20, 1
      %p64 = por %p62, %p63
      %p66 = scmp.ne.s32.totalorder %s51, %s65
      %p67 = scmp.eq.s32.totalorder %s20, 0
      %p68 = por %p66, %p67
      %s70 = sadd.s32 %s69, 1
      %p73 = scmp.eq.s32.totalorder %s14, 1
      %p74 = scmp.ne.s32.totalorder %s69, %s71
      %p75 = scmp.eq.s32.totalorder %s14, 0
      %p76 = por %p74, %p75
      %p77 = scmp.ne.s32.totalorder %s69, %s71
      %p78 = scmp.eq.s32.totalorder %s19, 1
      %p79 = por %p77, %p78
      %p80 = scmp.ne.s32.totalorder %s71, %s72
      %p81 = scmp.eq.s32.totalorder %s19, 0
      %p82 = por %p80, %p81
      %p83 = scmp.ne.s32.totalorder %s71, %s72
      %p84 = scmp.eq.s32.totalorder %s20, 1
      %p85 = por %p83, %p84
      %p87 = scmp.ne.s32.totalorder %s72, %s86
      %p88 = scmp.eq.s32.totalorder %s20, 0
      %p89 = por %p87, %p88
      %s91 = sadd.s32 %s90, 1
      %p94 = scmp.eq.s32.totalorder %s14, 1
      %p95 = scmp.ne.s32.totalorder %s90, %s92
      %p96 = scmp.eq.s32.totalorder %s14, 0
      %p97 = por %p95, %p96
      %p98 = scmp.ne.s32.totalorder %s90, %s92
      %p99 = scmp.eq.s32.totalorder %s19, 1
      %p100 = por %p98, %p99
      %p101 = scmp.ne.s32.totalorder %s92, %s93
      %p102 = scmp.eq.s32.totalorder %s19, 0
      %p103 = por %p101, %p102
      %p104 = scmp.ne.s32.totalorder %s92, %s93
      %p105 = scmp.eq.s32.totalorder %s20, 1
      %p106 = por %p104, %p105
      %p108 = scmp.ne.s32.totalorder %s93, %s107
      %p109 = scmp.eq.s32.totalorder %s20, 0
      %p110 = por %p108, %p109
      %s112 = sadd.s32 %s111, 1
      %p115 = scmp.eq.s32.totalorder %s14, 1
      %p116 = scmp.ne.s32.totalorder %s111, %s113
      %p117 = scmp.eq.s32.totalorder %s14, 0
      %p118 = por %p116, %p117
      %p119 = scmp.ne.s32.totalorder %s111, %s113
      %p120 = scmp.eq.s32.totalorder %s19, 1
      %p121 = por %p119, %p120
      %p122 = scmp.ne.s32.totalorder %s113, %s114
      %p123 = scmp.eq.s32.totalorder %s19, 0
      %p124 = por %p122, %p123
      %p125 = scmp.ne.s32.totalorder %s113, %s114
      %p126 = scmp.eq.s32.totalorder %s20, 1
      %p127 = por %p125, %p126
      %p129 = scmp.ne.s32.totalorder %s114, %s128
      %p130 = scmp.eq.s32.totalorder %s20, 0
      %p131 = por %p129, %p130
      %s132 = ssub.s32 %s14, %s21
      %p133 = scmp.eq.s32.totalorder %s132, 0
      %s135 = sadd.s32 %s134, 1
      %s136 = scalar_select %p133, %s134, %s135
      %p139 = pneg %p133
      %p140 = scmp.eq.s32.totalorder %s14, 1
      %p141 = por %p139, %p140
      %p142 = scmp.ne.s32.totalorder %s134, %s137
      %p143 = scmp.eq.s32.totalorder %s14, 0
      %p144 = por %p142, %p143
      %p145 = scmp.ne.s32.totalorder %s134, %s137
      %p146 = scmp.eq.s32.totalorder %s19, 1
      %p147 = por %p145, %p146
      %p148 = scmp.ne.s32.totalorder %s137, %s138
      %p149 = scmp.eq.s32.totalorder %s19, 0
      %p150 = por %p148, %p149
      %p151 = scmp.ne.s32.totalorder %s137, %s138
      %p152 = scmp.eq.s32.totalorder %s20, 1
      %p153 = por %p151, %p152
      %p155 = scmp.ne.s32.totalorder %s138, %s154
      %p156 = scmp.eq.s32.totalorder %s20, 0
      %p157 = por %p155, %p156
      %p158 = scmp.le.s32.totalorder 1, %s14
      %p159 = scmp.lt.s32.totalorder %s14, 3
      %p160 = pnand %p158, %p159
      %p161 = pneg %p160
      // Predicated region
      $region9: #{tpu_custom_call.1} parent=5 // pred_check
        _
      $region10: #{tpu_custom_call.1} parent=5 // pred_check_branch
        %163 = sbr.rel (%p160) target = $region12
      $region11: #{tpu_custom_call.1} parent=5 // pred_region
        %s164 = ssub.s32 %s14, 1
        // Predicated region
        $region13: #{tpu_custom_call.1} parent=11 // pred_check
          %p165 = pneg %p61
        $region14: #{tpu_custom_call.1} parent=11 // pred_check_branch
          %167 = sbr.rel (%p165) target = $region16
        $region15: #{tpu_custom_call.1} parent=11 // pred_region
          _
        $region16: #{tpu_custom_call.1} parent=11 // pred_fallthru
          _
        // Predicated region
        $region17: #{tpu_custom_call.1} parent=11 // pred_check
          %p168 = pneg %p82
        $region18: #{tpu_custom_call.1} parent=11 // pred_check_branch
          %170 = sbr.rel (%p168) target = $region20
        $region19: #{tpu_custom_call.1} parent=11 // pred_region
          _
        $region20: #{tpu_custom_call.1} parent=11 // pred_fallthru
          _
        // Predicated region
        $region21: #{tpu_custom_call.1} parent=11 // pred_check
          %p171 = pneg %p103
        $region22: #{tpu_custom_call.1} parent=11 // pred_check_branch
          %173 = sbr.rel (%p171) target = $region24
        $region23: #{tpu_custom_call.1} parent=11 // pred_region
          _
        $region24: #{tpu_custom_call.1} parent=11 // pred_fallthru
          _
        // Predicated region
        $region25: #{tpu_custom_call.1} parent=11 // pred_check
          %p174 = pneg %p124
        $region26: #{tpu_custom_call.1} parent=11 // pred_check_branch
          %176 = sbr.rel (%p174) target = $region28
        $region27: #{tpu_custom_call.1} parent=11 // pred_region
          _
        $region28: #{tpu_custom_call.1} parent=11 // pred_fallthru
          _
      $region12: #{tpu_custom_call.1} parent=5 // pred_fallthru
        _
      %p177 = scmp.lt.s32.totalorder %s14, 2
      // Predicated region
      $region29: #{tpu_custom_call.1} parent=5 // pred_check
        %p178 = pneg %p177
      $region30: #{tpu_custom_call.1} parent=5 // pred_check_branch
        %180 = sbr.rel (%p178) target = $region32
      $region31: #{tpu_custom_call.1} parent=5 // pred_region
        // Predicated region
        $region33: #{tpu_custom_call.1} parent=31 // pred_check
          %p181 = pneg %p34
        $region34: #{tpu_custom_call.1} parent=31 // pred_check_branch
          %183 = sbr.rel (%p181) target = $region36
        $region35: #{tpu_custom_call.1} parent=31 // pred_region
          %p184 = scmp.lt.s32.totalorder %s14, 1
          %s185 = scalar_select %p184, %s14, 1
          %s186 = smul.addr %s185, 8
          %s187 = scalar_lea.vmem %s0, %s186
        $region36: #{tpu_custom_call.1} parent=31 // pred_fallthru
          _
      $region32: #{tpu_custom_call.1} parent=5 // pred_fallthru
        _
      %p188 = scmp.le.s32.totalorder 1, %s14
      %p189 = scmp.lt.s32.totalorder %s14, 3
      %p190 = pnand %p188, %p189
      %p191 = pneg %p190
      // Predicated region
      $region37: #{tpu_custom_call.1} parent=5 // pred_check
        _
      $region38: #{tpu_custom_call.1} parent=5 // pred_check_branch
        %193 = sbr.rel (%p190) target = $region40
      $region39: #{tpu_custom_call.1} parent=5 // pred_region
        %s194 = ssub.s32 %s14, 1
        %p195 = scmp.lt.s32.totalorder %s19, 1
        %s196 = scalar_select %p195, %s19, 1
        %s197 = smul.addr %s196, 8
        %s198 = scalar_lea.vmem %s0, %s197
        %p199 = pneg %p40
        %p200 = pneg %p37
        %p201 = pneg %p61
        %p202 = pneg %p58
        %p203 = pneg %p82
        %p204 = pneg %p79
        %p205 = pneg %p103
        %p206 = pneg %p100
        %p207 = pneg %p124
        %p208 = pneg %p121
        %p209 = pneg %p150
        %p210 = pneg %p147
        %s211 = sand.u32 %s137, 1
        %s212 = scalar_lea.sflag [#allocation3], %s211
        %s213 = sand.u32 %s137, 1
        %s214 = smul.addr %s213, 8
        %s215 = scalar_lea.vmem [#allocation2], %s214
        %p216 = scmp.lt.s32.totalorder %s19, 1
        %s217 = scalar_select %p216, %s19, 1
        %s218 = smul.addr %s217, 8
        %s219 = scalar_lea.vmem %s0, %s218
        %v220 = vld [vmem:[%s219] sm:$0xff]
        %v221 = vld [vmem:[%s1] sm:$0xff]
        %v222 = vld [vmem:[%s1 + $0x8] sm:$0xff]
        %v223 = vld [vmem:[%s1 + $0x10] sm:$0xff]
        %v224 = vld [vmem:[%s1 + $0x18] sm:$0xff]
        %v225 = vld [vmem:[%s1 + $0x20] sm:$0xff]
        %v226 = vld [vmem:[%s1 + $0x28] sm:$0xff]
        %v227 = vld [vmem:[%s1 + $0x30] sm:$0xff]
        %v228 = vld [vmem:[%s1 + $0x38] sm:$0xff]
        %v229 = vld [vmem:[%s2] sm:$0x1]
        %v231 = vlaneseq
        %v232 = vshrl.u32 %v231, 7
        %v233 = vsub.s32 0, %v232
        %v234 = vrot.slane %v229, %v233
        %vm236 = vcmask 261120
        %v238 = vsel %vm236, %v220, 0
        %v241 = vsel %vm236, %v221, 0
        %v244 = vsel %vm236, %v222, 0
        %v247 = vsel %vm236, %v223, 0
        %v250 = vsel %vm236, %v224, 0
        %v253 = vsel %vm236, %v225, 0
        %v256 = vsel %vm236, %v226, 0
        %v259 = vsel %vm236, %v227, 0
        %v262 = vsel %vm236, %v228, 0
        %264 = vmatprep.subr.mxu0 0.0
        %265 = vmatpush1.xpose.msra.mxu0 %v241
        %266 = vmatprep.subr.mxu0 0.0
        %267 = vmatpush1.xpose.msra.mxu0 %v244
        %268 = vmatprep.subr.mxu0 0.0
        %269 = vmatpush1.xpose.msra.mxu0 %v247
        %270 = vmatprep.subr.mxu0 0.0
        %271 = vmatpush1.xpose.msra.mxu0 %v250
        %272 = vmatprep.subr.mxu0 0.0
        %273 = vmatpush1.xpose.msra.mxu0 %v253
        %274 = vmatprep.subr.mxu0 0.0
        %275 = vmatpush1.xpose.msra.mxu0 %v256
        %276 = vmatprep.subr.mxu0 0.0
        %277 = vmatpush1.xpose.msra.mxu0 %v259
        %278 = vmatprep.subr.mxu0 0.0
        %279 = vmatpush1.xpose.msra.mxu0 %v262
        %280 = vmatprep.subr.mxu0 0.0
        %281 = vmatpush1.xpose.msra.mxu0 0.0
        %282 = vmatprep.subr.mxu0 0.0
        %283 = vmatpush1.xpose.msra.mxu0 0.0
        %284 = vmatprep.subr.mxu0 0.0
        %285 = vmatpush1.xpose.msra.mxu0 0.0
        %286 = vmatprep.subr.mxu0 0.0
        %287 = vmatpush1.xpose.msra.mxu0 0.0
        %288 = vmatprep.subr.mxu0 0.0
        %289 = vmatpush1.xpose.msra.mxu0 0.0
        %290 = vmatprep.subr.mxu0 0.0
        %291 = vmatpush1.xpose.msra.mxu0 0.0
        %292 = vmatprep.subr.mxu0 0.0
        %293 = vmatpush1.xpose.msra.mxu0 0.0
        %294 = vmatprep.subr.mxu0 0.0
        %295 = vmatpush1.xpose.msra.mxu0 0.0
        %296 = vmatprep.subr.mxu0 0.0
        %297 = vmatpush1.xpose.msra.mxu0 0.0
        %298 = vmatprep.subr.mxu0 0.0
        %299 = vmatpush1.xpose.msra.mxu0 0.0
        %300 = vmatprep.subr.mxu0 0.0
        %301 = vmatpush1.xpose.msra.mxu0 0.0
        %302 = vmatprep.subr.mxu0 0.0
        %303 = vmatpush1.xpose.msra.mxu0 0.0
        %304 = vmatprep.subr.mxu0 0.0
        %305 = vmatpush1.xpose.msra.mxu0 0.0
        %306 = vmatprep.subr.mxu0 0.0
        %307 = vmatpush1.xpose.msra.mxu0 0.0
        %308 = vmatprep.subr.mxu0 0.0
        %309 = vmatpush1.xpose.msra.mxu0 0.0
        %310 = vmatprep.subr.mxu0 0.0
        %311 = vmatpush1.xpose.msra.mxu0 0.0
        %312 = vmatprep.subr.mxu0 0.0
        %313 = vmatpush1.xpose.msra.mxu0 0.0
        %314 = vmatprep.subr.mxu0 0.0
        %315 = vmatpush1.xpose.msra.mxu0 0.0
        %316 = vmatprep.subr.mxu0 0.0
        %317 = vmatpush1.xpose.msra.mxu0 0.0
        %318 = vmatprep.subr.mxu0 0.0
        %319 = vmatpush1.xpose.msra.mxu0 0.0
        %320 = vmatprep.subr.mxu0 0.0
        %321 = vmatpush1.xpose.msra.mxu0 0.0
        %322 = vmatprep.subr.mxu0 0.0
        %323 = vmatpush1.xpose.msra.mxu0 0.0
        %324 = vmatprep.subr.mxu0 0.0
        %325 = vmatpush1.xpose.msra.mxu0 0.0
        %326 = vmatprep.subr.mxu0 0.0
        %327 = vmatpush1.xpose.msra.mxu0 0.0
        %328 = vmatprep.mubr.f32.mxu0 0.0
        %329 = vmatmul.mubr.f32.gmra.mrb[0].mxu0 %v238
        %v330 = vpop.f32.mrb[0].mxu0
        %v331 = vadd.f32 %v234, %v330
        %v332 = vpop.f32.mrb[0].mxu0
        %333 = vdwg.mxu0
        %v334 = vmax.f32 %v331, 0.0
        %v335 = vld [vmem:[%s3] sm:$0xff]
        %v336 = vld [vmem:[%s3 + $0x8] sm:$0xff]
        %v337 = vld [vmem:[%s3 + $0x10] sm:$0xff]
        %v338 = vld [vmem:[%s3 + $0x18] sm:$0xff]
        %v339 = vld [vmem:[%s4] sm:$0x1]
        %v341 = vlaneseq
        %v342 = vshrl.u32 %v341, 7
        %v343 = vsub.s32 0, %v342
        %v344 = vrot.slane %v339, %v343
        %vm346 = vcmask 523264
        %v348 = vsel %vm346, %v334, 0
        %v351 = vsel %vm346, %v335, 0
        %v354 = vsel %vm346, %v336, 0
        %v357 = vsel %vm346, %v337, 0
        %v360 = vsel %vm346, %v338, 0
        %362 = vmatprep.subr.mxu0 0.0
        %363 = vmatpush1.xpose.msra.mxu0 %v351
        %364 = vmatprep.subr.mxu0 0.0
        %365 = vmatpush1.xpose.msra.mxu0 %v354
        %366 = vmatprep.subr.mxu0 0.0
        %367 = vmatpush1.xpose.msra.mxu0 %v357
        %368 = vmatprep.subr.mxu0 0.0
        %369 = vmatpush1.xpose.msra.mxu0 %v360
        %370 = vmatprep.subr.mxu0 0.0
        %371 = vmatpush1.xpose.msra.mxu0 0.0
        %372 = vmatprep.subr.mxu0 0.0
        %373 = vmatpush1.xpose.msra.mxu0 0.0
        %374 = vmatprep.subr.mxu0 0.0
        %375 = vmatpush1.xpose.msra.mxu0 0.0
        %376 = vmatprep.subr.mxu0 0.0
        %377 = vmatpush1.xpose.msra.mxu0 0.0
        %378 = vmatprep.subr.mxu0 0.0
        %379 = vmatpush1.xpose.msra.mxu0 0.0
        %380 = vmatprep.subr.mxu0 0.0
        %381 = vmatpush1.xpose.msra.mxu0 0.0
        %382 = vmatprep.subr.mxu0 0.0
        %383 = vmatpush1.xpose.msra.mxu0 0.0
        %384 = vmatprep.subr.mxu0 0.0
        %385 = vmatpush1.xpose.msra.mxu0 0.0
        %386 = vmatprep.subr.mxu0 0.0
        %387 = vmatpush1.xpose.msra.mxu0 0.0
        %388 = vmatprep.subr.mxu0 0.0
        %389 = vmatpush1.xpose.msra.mxu0 0.0
        %390 = vmatprep.subr.mxu0 0.0
        %391 = vmatpush1.xpose.msra.mxu0 0.0
        %392 = vmatprep.subr.mxu0 0.0
        %393 = vmatpush1.xpose.msra.mxu0 0.0
        %394 = vmatprep.subr.mxu0 0.0
        %395 = vmatpush1.xpose.msra.mxu0 0.0
        %396 = vmatprep.subr.mxu0 0.0
        %397 = vmatpush1.xpose.msra.mxu0 0.0
        %398 = vmatprep.subr.mxu0 0.0
        %399 = vmatpush1.xpose.msra.mxu0 0.0
        %400 = vmatprep.subr.mxu0 0.0
        %401 = vmatpush1.xpose.msra.mxu0 0.0
        %402 = vmatprep.subr.mxu0 0.0
        %403 = vmatpush1.xpose.msra.mxu0 0.0
        %404 = vmatprep.subr.mxu0 0.0
        %405 = vmatpush1.xpose.msra.mxu0 0.0
        %406 = vmatprep.subr.mxu0 0.0
        %407 = vmatpush1.xpose.msra.mxu0 0.0
        %408 = vmatprep.subr.mxu0 0.0
        %409 = vmatpush1.xpose.msra.mxu0 0.0
        %410 = vmatprep.subr.mxu0 0.0
        %411 = vmatpush1.xpose.msra.mxu0 0.0
        %412 = vmatprep.subr.mxu0 0.0
        %413 = vmatpush1.xpose.msra.mxu0 0.0
        %414 = vmatprep.subr.mxu0 0.0
        %415 = vmatpush1.xpose.msra.mxu0 0.0
        %416 = vmatprep.subr.mxu0 0.0
        %417 = vmatpush1.xpose.msra.mxu0 0.0
        %418 = vmatprep.subr.mxu0 0.0
        %419 = vmatpush1.xpose.msra.mxu0 0.0
        %420 = vmatprep.subr.mxu0 0.0
        %421 = vmatpush1.xpose.msra.mxu0 0.0
        %422 = vmatprep.subr.mxu0 0.0
        %423 = vmatpush1.xpose.msra.mxu0 0.0
        %424 = vmatprep.subr.mxu0 0.0
        %425 = vmatpush1.xpose.msra.mxu0 0.0
        %426 = vmatprep.mubr.f32.mxu0 0.0
        %427 = vmatmul.mubr.f32.gmra.mrb[0].mxu0 %v348
        %v428 = vpop.f32.mrb[0].mxu0
        %v429 = vadd.f32 %v344, %v428
        %v430 = vpop.f32.mrb[0].mxu0
        %431 = vdwg.mxu0
        %432 = vst.msk [vmem:[%s215] sm:$0xff] %vm236, %v429
        %s433 = sand.u32 %s137, 1
        %s434 = scalar_lea.sflag [#allocation3], %s433
        %s435 = sand.u32 %s137, 1
        %s436 = smul.addr %s435, 8
        %s437 = scalar_lea.vmem [#allocation2], %s436
        // Predicated region
        $region41: #{tpu_custom_call.1} parent=39 // pred_check
          %p438 = pneg %p147
        $region42: #{tpu_custom_call.1} parent=39 // pred_check_branch
          %440 = sbr.rel (%p438) target = $region44
        $region43: #{tpu_custom_call.1} parent=39 // pred_region
          %s442 = ssub.s32 128, 128
          %443 = vsyncadd %s434, %s442
          %s444 = smul.addr %s19, 128
          %s445 = scalar_lea.hbm %s5, %s444
          %s447 = sshll.u32 %s437, 4
          %s448 = int_to_ptr.vmem [resolvable:$true] %s447
          %450 = dma.vmem_to_hbm [thread:$0]  %s448, 128, %s445, %s434
        $region44: #{tpu_custom_call.1} parent=39 // pred_fallthru
          _
      $region40: #{tpu_custom_call.1} parent=5 // pred_fallthru
        _
      %p451 = scmp.le.s32.totalorder 2, %s14
      // Predicated region
      $region45: #{tpu_custom_call.1} parent=5 // pred_check
        %p452 = pneg %p451
      $region46: #{tpu_custom_call.1} parent=5 // pred_check_branch
        %454 = sbr.rel (%p452) target = $region48
      $region47: #{tpu_custom_call.1} parent=5 // pred_region
        %s455 = ssub.s32 %s14, 2
        // Predicated region
        $region49: #{tpu_custom_call.1} parent=47 // pred_check
          %p456 = pneg %p153
        $region50: #{tpu_custom_call.1} parent=47 // pred_check_branch
          %458 = sbr.rel (%p456) target = $region52
        $region51: #{tpu_custom_call.1} parent=47 // pred_region
          %s459 = sand.u32 %s138, 1
          %s460 = scalar_lea.sflag [#allocation3], %s459
          %s461 = sand.u32 %s138, 1
          %s462 = smul.addr %s461, 8
          %s463 = scalar_lea.vmem [#allocation2], %s462
          %464 = dma.done %s460, 128
        $region52: #{tpu_custom_call.1} parent=47 // pred_fallthru
          _
      $region48: #{tpu_custom_call.1} parent=5 // pred_fallthru
        _
    $region6: #{tpu_custom_call.1} parent=1 // loop_footer
      %s18 = sadd.s32 1, %s14
    $region7: #{tpu_custom_call.1} parent=1 // loop_footer_branch
      %13 = sbr.rel target = $region3
    $region8: #{tpu_custom_call.1} parent=1 // loop_exit
      _
    %465 = vsyncpa [#allocation3], 1
    %s466 = scalar_lea.sflag [#allocation3], 1
    %467 = vsyncpa %s466, 1

</llo_original>
